<compile_context>
chip_gen: v6e
topology: v6e:2x2x1
jax: 0.10.0
libtpu: 0.0.40
codegen_flags: <defaults>
</compile_context>

<pallas_src>
import jax
import jax.numpy as jnp
from jax.experimental import pallas as pl
from jax.experimental.pallas import tpu as pltpu


def nsp_head_kernel(resid_ref, w_ref, b_ref, out_ref):
    # resid_ref: (TM, d_model) VMEM   w_ref: (d_model, 2) VMEM
    # b_ref:     (1, 2) VMEM          out_ref: (TM, 2) VMEM
    logits = jnp.dot(
        resid_ref[...], w_ref[...], preferred_element_type=jnp.float32
    )
    # Single broadcasting vadd of the (1, 2) bias across the (TM, 2) logits.
    out_ref[...] = (logits + b_ref[...]).astype(out_ref.dtype)


def _vmem_budget_bytes() -> int:
    """~85% of this generation's physical VMEM (v5e/v6e 128 MiB, v7x 64 MiB)."""
    try:
        cap = int(pltpu.get_tpu_info().vmem_capacity_bytes)
    except Exception:
        cap = 64 << 20  # conservative fallback (v7x per-TC size)
    return int(0.85 * cap)


def bert_nsp_head(
    resid: jax.Array,
    W: jax.Array,
    b: jax.Array,
    *,
    tm: int = 2048,
    out_dtype=jnp.float32,
    resid_buffer_count: int = 2,
) -> jax.Array:
    """Computes resid @ W + b  ->  [batch, 2] logits (float32 by default)."""
    batch, d_model = resid.shape
    assert W.shape == (d_model, 2)
    assert b.shape == (2,)

    in_bytes = jnp.dtype(resid.dtype).itemsize
    w_bytes = jnp.dtype(W.dtype).itemsize
    out_bytes = jnp.dtype(out_dtype).itemsize

    # Dtype-aware sublane alignment: f32 -> 8, bf16 -> 16, int8/fp8 -> 32.
    align = max(8, 32 // max(1, in_bytes))

    # --- Batch tile selection -------------------------------------------
    # Full batch in one block if it fits; otherwise an alignment-rounded tile.
    tm = min(tm, batch)
    if tm < batch:
        tm = max(align, (tm // align) * align)

    # For large batches, keep >= 4 grid steps so double-buffering overlaps
    # and both v7x TensorCores get work — but never shrink the tile below 256.
    min_split_tm = max(align, 256)
    if batch >= 4 * min_split_tm and pl.cdiv(batch, tm) < 4:
        tm_cap = max(min_split_tm, ((batch // 4) // align) * align)
        tm = min(tm, tm_cap)

    nbuf = max(2, int(resid_buffer_count))

    def vmem_needed(tm_: int) -> int:
        return (
            nbuf * tm_ * d_model * in_bytes      # resid multi-buffer
            + 2 * d_model * 128 * w_bytes        # W (lane-padded to 128)
            + 2 * tm_ * 128 * out_bytes          # out (lane-padded to 128)
            + 2 * 8 * 128 * 4                    # bias tile (padded), tiny
        )

    budget = _vmem_budget_bytes()
    # Shrink the tile if the pipeline would not fit this generation's VMEM.
    while tm > align and vmem_needed(tm) > budget:
        tm = max(align, ((tm // 2) // align) * align)
    tm = min(tm, batch)

    grid = (pl.cdiv(batch, tm),)

    needed = vmem_needed(tm)
    # Never clamp below `needed`; cap at the generation-aware budget.
    vmem_limit = int(min(needed + (8 << 20), max(budget, needed + (1 << 20))))
    vmem_limit = max(vmem_limit, needed + (1 << 20))

    # Bias as a (1, 2) f32 row for a broadcasting add inside the kernel.
    b_row = b.astype(jnp.float32).reshape(1, 2)

    cost = pl.CostEstimate(
        flops=2 * batch * d_model * 2,
        transcendentals=0,
        bytes_accessed=(
            batch * d_model * in_bytes
            + d_model * 2 * w_bytes
            + 2 * 4
            + batch * 2 * out_bytes
        ),
    )

    resid_spec_kwargs = {}
    if nbuf != 2:
        resid_spec_kwargs["pipeline_mode"] = pl.Buffered(nbuf)

    return pl.pallas_call(
        nsp_head_kernel,
        out_shape=jax.ShapeDtypeStruct((batch, 2), out_dtype),
        grid=grid,
        in_specs=[
            pl.BlockSpec((tm, d_model), lambda i: (i, 0), **resid_spec_kwargs),
            pl.BlockSpec((d_model, 2), lambda i: (0, 0)),   # VMEM-resident W
            pl.BlockSpec((1, 2), lambda i: (0, 0)),          # VMEM-resident bias
        ],
        out_specs=pl.BlockSpec((tm, 2), lambda i: (i, 0)),
        compiler_params=pltpu.CompilerParams(
            dimension_semantics=("parallel",),
            vmem_limit_bytes=vmem_limit,
        ),
        cost_estimate=cost,
    )(resid, W, b_row)


if __name__ == "__main__":
    key = jax.random.PRNGKey(0)
    k_resid, k_w, k_resid2, k_resid3 = jax.random.split(key, 4)

    # Small shapes consistent with the module: [batch, d_model] -> [batch, 2].
    batch, d_model = 8, 32
    resid = jax.random.normal(k_resid, (batch, d_model), dtype=jnp.float32)
    # Deterministic synthetic parameter init (torch.empty in the original is
    # uninitialized; use a seeded normal).  Nonzero bias to exercise the add.
    W = jax.random.normal(k_w, (d_model, 2), dtype=jnp.float32) * 0.02
    b = jnp.arange(2, dtype=jnp.float32) * 0.1

    out = jax.block_until_ready(bert_nsp_head(resid, W, b))
    ref = resid @ W + b
    assert out.shape == (batch, 2)
    assert out.dtype == jnp.float32
    assert jnp.allclose(out, ref, atol=1e-5, rtol=1e-5), "mismatch vs reference"

    # Exercise the batch grid (multiple tiles + ragged final tile).
    batch2 = 20
    resid2 = jax.random.normal(k_resid2, (batch2, d_model), dtype=jnp.float32)
    out2 = jax.block_until_ready(bert_nsp_head(resid2, W, b, tm=8))
    ref2 = resid2 @ W + b
    assert out2.shape == (batch2, 2)
    assert jnp.allclose(out2, ref2, atol=1e-5, rtol=1e-5), "mismatch (gridded)"

    # Exercise bf16 input with dtype-aware (multiple-of-16) tile alignment.
    batch3 = 48
    resid3 = jax.random.normal(
        k_resid3, (batch3, d_model), dtype=jnp.float32
    ).astype(jnp.bfloat16)
    W_bf16 = W.astype(jnp.bfloat16)
    out3 = jax.block_until_ready(bert_nsp_head(resid3, W_bf16, b, tm=16))
    ref3 = resid3.astype(jnp.float32) @ W_bf16.astype(jnp.float32) + b
    assert out3.shape == (batch3, 2)
    assert jnp.allclose(out3, ref3, atol=2e-2, rtol=2e-2), "mismatch (bf16)"

    print("KERNEL_OK")
</pallas_src>

<mosaic_0001>
module attributes {stable_mosaic.version = 11 : i64} {
  func.func @nsp_head_kernel(%arg0: i32, %arg1: memref<8x32xf32, #tpu.memory_space<vmem>>, %arg2: memref<32x2xf32, #tpu.memory_space<vmem>>, %arg3: memref<1x2xf32, #tpu.memory_space<vmem>>, %arg4: memref<8x2xf32, #tpu.memory_space<vmem>>) attributes {dimension_semantics = [#tpu.dimension_semantics<parallel>], iteration_bounds = array<i64: 1>, scalar_prefetch = 0 : i64, scratch_operands = 0 : i64, tpu.core_type = #tpu.core_type<tc>, window_params = [{transform_indices = @transform_0, window_bounds = array<i64: 8, 32>}, {pipeline_mode = #tpu.pipeline_mode<synchronous>, transform_indices = @transform_1, window_bounds = array<i64: 32, 2>}, {pipeline_mode = #tpu.pipeline_mode<synchronous>, transform_indices = @transform_2, window_bounds = array<i64: 1, 2>}, {transform_indices = @transform_3, window_bounds = array<i64: 8, 2>}]} {
    %c0 = arith.constant 0 : index
    %c0_0 = arith.constant 0 : index
    %0 = vector.load %arg1[%c0, %c0_0] : memref<8x32xf32, #tpu.memory_space<vmem>>, vector<8x32xf32>
    %c0_1 = arith.constant 0 : index
    %c0_2 = arith.constant 0 : index
    %1 = vector.load %arg2[%c0_1, %c0_2] : memref<32x2xf32, #tpu.memory_space<vmem>>, vector<32x2xf32>
    %cst = arith.constant dense<0.000000e+00> : vector<8x2xf32>
    %2 = tpu.matmul %0, %1, %cst {dimension_numbers = #tpu.dot_dimension_numbers<[1], [0], [0], [1], [0, 0, 1, 1], [], []>} : vector<8x32xf32>, vector<32x2xf32>, vector<8x2xf32> -> vector<8x2xf32>
    %c0_3 = arith.constant 0 : index
    %c0_4 = arith.constant 0 : index
    %3 = vector.load %arg3[%c0_3, %c0_4] : memref<1x2xf32, #tpu.memory_space<vmem>>, vector<1x2xf32>
    %4 = vector.broadcast %3 : vector<1x2xf32> to vector<8x2xf32>
    %5 = arith.addf %2, %4 : vector<8x2xf32>
    %c0_5 = arith.constant 0 : index
    %c0_6 = arith.constant 0 : index
    %6 = vector.load %arg4[%c0_5, %c0_6] : memref<8x2xf32, #tpu.memory_space<vmem>>, vector<8x2xf32>
    tpu.vector_store %arg4[%c0_5, %c0_6], %5 {strides = array<i32>} : memref<8x2xf32, #tpu.memory_space<vmem>>, vector<8x2xf32>,
    return
  }
  func.func @transform_0(%arg0: i32) -> (i32, i32) {
    %c0_i32 = arith.constant 0 : i32
    %c0_i32_0 = arith.constant 0 : i32
    return %arg0, %c0_i32 : i32, i32
  }
  func.func @transform_1(%arg0: i32) -> (i32, i32) {
    %c0_i32 = arith.constant 0 : i32
    %c0_i32_0 = arith.constant 0 : i32
    %c0_i32_1 = arith.constant 0 : i32
    return %c0_i32, %c0_i32_0 : i32, i32
  }
  func.func @transform_2(%arg0: i32) -> (i32, i32) {
    %c0_i32 = arith.constant 0 : i32
    %c0_i32_0 = arith.constant 0 : i32
    %c0_i32_1 = arith.constant 0 : i32
    return %c0_i32, %c0_i32_0 : i32, i32
  }
  func.func @transform_3(%arg0: i32) -> (i32, i32) {
    %c0_i32 = arith.constant 0 : i32
    %c0_i32_0 = arith.constant 0 : i32
    return %arg0, %c0_i32 : i32, i32
  }
}

</mosaic_0001>

<llo_original>
// kernel: tpu_custom_call.1
$region0: #{tpu_custom_call.1}
  #allocation0 [shape = 'u32[]', space=smem, size = 0x4, offset = 0x4, fixed_abs, tag = 'smem constant byte address 0x4 - core index']
  #allocation1 [shape = 'u32[144,128]{1,0:T(1,128)}', space=vmem, size = 0x12000, scoped, tag = 'internal scratch']
  %s0 = inlined_call_operand.vmem [shape: f32[8,32], index: 0, kind: input, shape index: {}]
  %s1 = inlined_call_operand.vmem [shape: f32[32,2], index: 1, kind: input, shape index: {}]
  %s2 = inlined_call_operand.vmem [shape: f32[1,2], index: 2, kind: input, shape index: {}]
  %s3 = inlined_call_operand.vmem [shape: f32[8,2], index: 3, kind: output, shape index: {}]
  %s4 = sld [smem:[#allocation0]]
  $region22: #{tpu_custom_call.1} parent=0
    _
  %s6 = ssub.s32 1, %s4
  %s7 = scalar_select 0, %s6, %s4
  // Predicated region
  $region2: #{tpu_custom_call.1} parent=0 // pred_check
    _
  $region3: #{tpu_custom_call.1} parent=0 // pred_check_branch
    %9 = sbr.rel (0) target = $region5
  $region4: #{tpu_custom_call.1} parent=0 // pred_region
    _
  $region5: #{tpu_custom_call.1} parent=0 // pred_fallthru
    _
  // Predicated region
  $region6: #{tpu_custom_call.1} parent=0 // pred_check
    _
  $region7: #{tpu_custom_call.1} parent=0 // pred_check_branch
    %11 = sbr.rel (0) target = $region9
  $region8: #{tpu_custom_call.1} parent=0 // pred_region
    _
  $region9: #{tpu_custom_call.1} parent=0 // pred_fallthru
    _
  // Predicated region
  $region10: #{tpu_custom_call.1} parent=0 // pred_check
    _
  $region11: #{tpu_custom_call.1} parent=0 // pred_check_branch
    %13 = sbr.rel (0) target = $region13
  $region12: #{tpu_custom_call.1} parent=0 // pred_region
    _
  $region13: #{tpu_custom_call.1} parent=0 // pred_fallthru
    _
  %v14 = vld [vmem:[%s0] sm:$0xff]
  %v15 = vld [vmem:[%s1] sm:$0xff]
  %v16 = vld [vmem:[%s1 + $0x8] sm:$0xff]
  %v17 = vld [vmem:[%s1 + $0x10] sm:$0xff]
  %v18 = vld [vmem:[%s1 + $0x18] sm:$0xff]
  %v19 = vld [vmem:[%s2] sm:$0x1]
  %v21 = vlaneseq
  %v22 = vshrl.u32 %v21, 7
  %v23 = vsub.s32 0, %v22
  %v24 = vrot.slane %v19, %v23
  %vm26 = vcmask 261120
  %v28 = vsel %vm26, %v14, 0
  %30 = vmatprep.subr.mxu0 0.0
  %31 = vmatpush1.msra.mxu0 0.0
  %32 = vmatprep.subr.mxu0 0.0
  %33 = vmatpush1.msra.mxu0 0.0
  %34 = vmatprep.subr.mxu0 0.0
  %35 = vmatpush1.msra.mxu0 0.0
  %36 = vmatprep.subr.mxu0 0.0
  %37 = vmatpush1.msra.mxu0 0.0
  %38 = vmatprep.subr.mxu0 0.0
  %39 = vmatpush1.msra.mxu0 0.0
  %40 = vmatprep.subr.mxu0 0.0
  %41 = vmatpush1.msra.mxu0 0.0
  %42 = vmatprep.subr.mxu0 0.0
  %43 = vmatpush1.msra.mxu0 0.0
  %44 = vmatprep.subr.mxu0 0.0
  %45 = vmatpush1.msra.mxu0 0.0
  %46 = vmatprep.subr.mxu0 0.0
  %47 = vmatpush1.msra.mxu0 0.0
  %48 = vmatprep.subr.mxu0 0.0
  %49 = vmatpush1.msra.mxu0 0.0
  %50 = vmatprep.subr.mxu0 0.0
  %51 = vmatpush1.msra.mxu0 0.0
  %52 = vmatprep.subr.mxu0 0.0
  %53 = vmatpush1.msra.mxu0 0.0
  %54 = vmatprep.subr.mxu0 0.0
  %55 = vmatpush1.msra.mxu0 %v18
  %56 = vmatprep.subr.mxu0 0.0
  %57 = vmatpush1.msra.mxu0 %v17
  %58 = vmatprep.subr.mxu0 0.0
  %59 = vmatpush1.msra.mxu0 %v16
  %60 = vmatprep.subr.mxu0 0.0
  %61 = vmatpush1.msra.mxu0 %v15
  %62 = vmatprep.subr.mxu0 0.0
  %63 = vmatpush2.msra.mxu0 0.0
  %64 = vmatprep.subr.mxu0 0.0
  %65 = vmatpush2.msra.mxu0 0.0
  %66 = vmatprep.subr.mxu0 0.0
  %67 = vmatpush2.msra.mxu0 0.0
  %68 = vmatprep.subr.mxu0 0.0
  %69 = vmatpush2.msra.mxu0 0.0
  %70 = vmatprep.subr.mxu0 0.0
  %71 = vmatpush2.msra.mxu0 0.0
  %72 = vmatprep.subr.mxu0 0.0
  %73 = vmatpush2.msra.mxu0 0.0
  %74 = vmatprep.subr.mxu0 0.0
  %75 = vmatpush2.msra.mxu0 0.0
  %76 = vmatprep.subr.mxu0 0.0
  %77 = vmatpush2.msra.mxu0 0.0
  %78 = vmatprep.subr.mxu0 0.0
  %79 = vmatpush2.msra.mxu0 0.0
  %80 = vmatprep.subr.mxu0 0.0
  %81 = vmatpush2.msra.mxu0 0.0
  %82 = vmatprep.subr.mxu0 0.0
  %83 = vmatpush2.msra.mxu0 0.0
  %84 = vmatprep.subr.mxu0 0.0
  %85 = vmatpush2.msra.mxu0 0.0
  %86 = vmatprep.subr.mxu0 0.0
  %87 = vmatpush2.msra.mxu0 0.0
  %88 = vmatprep.subr.mxu0 0.0
  %89 = vmatpush2.msra.mxu0 0.0
  %90 = vmatprep.subr.mxu0 0.0
  %91 = vmatpush2.msra.mxu0 0.0
  %92 = vmatprep.subr.mxu0 0.0
  %93 = vmatpush2.msra.mxu0 0.0
  %94 = vmatprep.mubr.f32.mxu0 0.0
  %95 = vmatmul.mubr.f32.gmra.mxu0 %v28
  %v96 = vpop.f32.mrf.mxu0
  %v97 = vadd.f32 %v24, %v96
  %v98 = vpop.f32.mrf.mxu0
  %99 = vdwg.mxu0
  %vm100 = vcmask 15360
  %101 = vst.msk [vmem:[%s3] sm:$0xff] %vm100, %v97
  // Predicated region
  $region14: #{tpu_custom_call.1} parent=0 // pred_check
    _
  $region15: #{tpu_custom_call.1} parent=0 // pred_check_branch
    %103 = sbr.rel (0) target = $region17
  $region16: #{tpu_custom_call.1} parent=0 // pred_region
    _
  $region17: #{tpu_custom_call.1} parent=0 // pred_fallthru
    _
  // Predicated region
  $region18: #{tpu_custom_call.1} parent=0 // pred_check
    _
  $region19: #{tpu_custom_call.1} parent=0 // pred_check_branch
    %105 = sbr.rel (0) target = $region21
  $region20: #{tpu_custom_call.1} parent=0 // pred_region
    _
  $region21: #{tpu_custom_call.1} parent=0 // pred_fallthru
    _

</llo_original>
